<compile_context>
chip_gen: v5e
topology: v5e:2x2
jax: 0.10.0
libtpu: 0.0.40
codegen_flags: <defaults>
</compile_context>

<pallas_src>
import numpy as np
import jax
import jax.numpy as jnp
from jax import lax
from jax.experimental import pallas as pl
from jax.experimental.pallas import tpu as pltpu

_BIG_NEG = 1e30


def _ln(v, g, b, eps=1e-5):
    mu = jnp.mean(v, axis=-1, keepdims=True)
    var = jnp.mean((v - mu) ** 2, axis=-1, keepdims=True)
    return (v - mu) * lax.rsqrt(var + eps) * g + b


# --------------------------------------------------------------------------
# Kernel A: masked max-pool of the raw encoder output -> pooled context (B,1,D)
# --------------------------------------------------------------------------
def _masked_maxpool_kernel(x_ref, mask_ref, out_ref):
    s = pl.program_id(1)
    neg = (mask_ref[0] - 1.0) * _BIG_NEG                       # (tS, 1)
    tile_max = jnp.max(x_ref[0] + neg, axis=0, keepdims=True)  # (1, D)

    @pl.when(s == 0)
    def _():
        out_ref[0] = jnp.full_like(out_ref[0], -_BIG_NEG)

    out_ref[0] = jnp.maximum(out_ref[0], tile_max)


# --------------------------------------------------------------------------
# Kernel B: FiLM conditioning + second masked max-pool -> final_pooled (B,1,D)
# --------------------------------------------------------------------------
def _film_kernel(
    x_ref,        # (1, tS, D)  f32  ESM sequence output tile
    mask_ref,     # (1, tS, 1)  f32  attention mask tile
    chem_ref,     # (1, tS, 6)  f32  [seq_chem | rec_chem]
    pooled_ref,   # (1, 1, D)   f32  pooled context (from kernel A)
    vecd_ref,     # (5, D)      f32  [lnx_g, lnx_b, cp_b2, cp_lng, cp_lnb]
    cpw1b_ref,    # (4, 64)     f32  [cp_w1 rows 0..2 ; cp_b1]
    cpw2_ref,     # (64, D)     bf16
    wx_ref,       # (D, 2D)     bf16 [wxg | wxb]
    wz_ref,       # (D, 2D)     bf16 [wzg | wzb]
    bf_ref,       # (1, 2D)     f32  [bfg | bfb]
    fp_ref,       # (1, 1, D)   f32  OUTPUT: running masked max of conditioned
):
    s = pl.program_id(1)
    tS = x_ref.shape[1]
    D = x_ref.shape[2]

    x = x_ref[0]                                    # (tS, D)
    neg = (mask_ref[0] - 1.0) * _BIG_NEG            # (tS, 1) additive mask bias

    vecd = vecd_ref[...]
    x_n = _ln(x, vecd[0:1, :], vecd[1:2, :])        # (tS, D)  f32

    # chemical projection: K=3 first layer on the VPU, second layer on the MXU,
    # seq + receptor batched along the sublane axis (one matmul, one LayerNorm)
    c = chem_ref[0]                                 # (tS, 6)
    w1b = cpw1b_ref[...]                            # (4, 64)

    def chem_first(c3):                             # (tS, 3) -> (tS, 64), VPU
        h = (c3[:, 0:1] * w1b[0:1, :] + c3[:, 1:2] * w1b[1:2, :]
             + c3[:, 2:3] * w1b[2:3, :] + w1b[3:4, :])
        return jnp.maximum(h, 0.0)

    h64 = jnp.concatenate([chem_first(c[:, 0:3]), chem_first(c[:, 3:6])],
                          axis=0)                   # (2*tS, 64)
    hD = jnp.dot(h64.astype(jnp.bfloat16), cpw2_ref[...],
                 preferred_element_type=jnp.float32) + vecd[2:3, :]
    hD = _ln(hD, vecd[3:4, :], vecd[4:5, :])        # (2*tS, D)
    z = pooled_ref[0] + hD[:tS, :] + hD[tS:, :]     # (tS, D)

    # FiLM: [gamma|beta] = x_n @ [Wxg|Wxb] + z @ [Wzg|Wzb] + [bg|bb]
    gb = (jnp.dot(x_n.astype(jnp.bfloat16), wx_ref[...],
                  preferred_element_type=jnp.float32)
          + jnp.dot(z.astype(jnp.bfloat16), wz_ref[...],
                    preferred_element_type=jnp.float32)
          + bf_ref[...])                            # (tS, 2D)
    conditioned = gb[:, :D] * x_n + gb[:, D:]       # dropout(0.1) identity

    tile_max = jnp.max(conditioned + neg, axis=0, keepdims=True)   # (1, D)

    @pl.when(s == 0)
    def _():
        fp_ref[0] = jnp.full_like(fp_ref[0], -_BIG_NEG)

    fp_ref[0] = jnp.maximum(fp_ref[0], tile_max)


# --------------------------------------------------------------------------
# Kernel C: the two classifier heads, batched over B in a single call
# --------------------------------------------------------------------------
def _heads_kernel(fp_ref, hw1_ref, hb1_ref, hln_ref, hw2_ref, hb2_ref, out_ref):
    # fp: (B, D) f32; hw1: (D, 2H) bf16 = [c1w1 | c2w1]; hb1: (1, 2H) f32;
    # hln: (4, H) f32 = [c1_g, c1_b, c2_g, c2_b]; hw2: (2H, 4) bf16 block-diag;
    # hb2: (1, 4) f32; out: (B, 4) = [logits_stage1 | logits_stage2]
    H = hln_ref.shape[-1]
    h = jnp.dot(fp_ref[...].astype(jnp.bfloat16), hw1_ref[...],
                preferred_element_type=jnp.float32) + hb1_ref[...]     # (B, 2H)
    hln = hln_ref[...]
    h1 = jnp.maximum(_ln(h[:, :H], hln[0:1, :], hln[1:2, :]), 0.0)     # drop=id
    h2 = jnp.maximum(_ln(h[:, H:], hln[2:3, :], hln[3:4, :]), 0.0)
    hc = jnp.concatenate([h1, h2], axis=-1)                            # (B, 2H)
    out_ref[...] = (jnp.dot(hc.astype(jnp.bfloat16), hw2_ref[...],
                            preferred_element_type=jnp.float32)
                    + hb2_ref[...])


# --------------------------------------------------------------------------
# Parameter init (deterministic, synthetic) & packing for the kernels
# --------------------------------------------------------------------------
def init_params(key, D):
    H = D // 2
    keys = iter(jax.random.split(key, 40))

    def nrm(shape, scale):
        return jax.random.normal(next(keys), shape, dtype=jnp.float32) * scale

    p = {}
    p["lnx_g"] = 1.0 + 0.1 * nrm((1, D), 1.0)
    p["lnx_b"] = 0.1 * nrm((1, D), 1.0)
    p["cp_w1"] = nrm((3, 64), 1.0 / np.sqrt(3))
    p["cp_b1"] = 0.01 * nrm((1, 64), 1.0)
    p["cp_w2"] = nrm((64, D), 1.0 / np.sqrt(64))
    p["cp_b2"] = 0.01 * nrm((1, D), 1.0)
    p["cp_lng"] = 1.0 + 0.1 * nrm((1, D), 1.0)
    p["cp_lnb"] = 0.1 * nrm((1, D), 1.0)
    Wf = nrm((2 * D, 2 * D), 1.0 / np.sqrt(2 * D))
    bf = 0.01 * nrm((1, 2 * D), 1.0)
    p["wxg"], p["wxb"] = Wf[:D, :D], Wf[:D, D:]
    p["wzg"], p["wzb"] = Wf[D:, :D], Wf[D:, D:]
    p["bfg"], p["bfb"] = bf[:, :D], bf[:, D:]
    for name in ("c1", "c2"):
        p[f"{name}w1"] = nrm((D, H), 1.0 / np.sqrt(D))
        p[f"{name}b1"] = 0.01 * nrm((1, H), 1.0)
        p[f"{name}lng"] = 1.0 + 0.1 * nrm((1, H), 1.0)
        p[f"{name}lnb"] = 0.1 * nrm((1, H), 1.0)
        p[f"{name}w2"] = nrm((H, 2), 1.0 / np.sqrt(H))
        p[f"{name}b2"] = 0.01 * nrm((1, 2), 1.0)
    return p


def pack_params(p, D):
    H = D // 2
    bf16 = jnp.bfloat16
    kp = {}
    kp["vecd"] = jnp.concatenate(
        [p["lnx_g"], p["lnx_b"], p["cp_b2"], p["cp_lng"], p["cp_lnb"]], axis=0)
    kp["cpw1b"] = jnp.concatenate([p["cp_w1"], p["cp_b1"]], axis=0)      # (4,64)
    kp["cpw2"] = p["cp_w2"].astype(bf16)                                 # (64,D)
    kp["wx"] = jnp.concatenate([p["wxg"], p["wxb"]], axis=1).astype(bf16)
    kp["wz"] = jnp.concatenate([p["wzg"], p["wzb"]], axis=1).astype(bf16)
    kp["bf"] = jnp.concatenate([p["bfg"], p["bfb"]], axis=1)             # (1,2D)
    kp["hw1"] = jnp.concatenate([p["c1w1"], p["c2w1"]], axis=1).astype(bf16)
    kp["hb1"] = jnp.concatenate([p["c1b1"], p["c2b1"]], axis=1)          # (1,2H)
    kp["hln"] = jnp.concatenate(
        [p["c1lng"], p["c1lnb"], p["c2lng"], p["c2lnb"]], axis=0)        # (4,H)
    zeros = jnp.zeros((H, 2), jnp.float32)
    kp["hw2"] = jnp.concatenate(
        [jnp.concatenate([p["c1w2"], zeros], axis=1),
         jnp.concatenate([zeros, p["c2w2"]], axis=1)], axis=0).astype(bf16)
    kp["hb2"] = jnp.concatenate([p["c1b2"], p["c2b2"]], axis=1)          # (1,4)
    return kp


# --------------------------------------------------------------------------
# Wrapper
# --------------------------------------------------------------------------
def forward_pallas(sequence_output, mask, chemical_features, params, *, block_s=None):
    """sequence_output: (B,S,D) f32, mask: (B,S) bool, chemical_features: (B,S,6)."""
    B, S, D = sequence_output.shape
    if block_s is None or block_s >= S:
        block_s = S
    assert S % block_s == 0, "block_s must divide S"
    nS = S // block_s

    mask_f = mask.astype(jnp.float32)[..., None]          # (B, S, 1)
    kp = pack_params(params, D)

    seq_spec = pl.BlockSpec((1, block_s, D), lambda b, s: (b, s, 0))
    mask_spec = pl.BlockSpec((1, block_s, 1), lambda b, s: (b, s, 0))
    chem_spec = pl.BlockSpec((1, block_s, 6), lambda b, s: (b, s, 0))
    pooled_spec = pl.BlockSpec((1, 1, D), lambda b, s: (b, 0, 0))

    def resident(arr):
        nd = arr.ndim
        return pl.BlockSpec(arr.shape, lambda b, s, _nd=nd: (0,) * _nd)

    cparams = pltpu.CompilerParams(
        dimension_semantics=("parallel", "arbitrary"),
        vmem_limit_bytes=48 * 1024 * 1024)

    # 1) masked max-pool of the raw encoder output -> pooled context (B,1,D)
    pooled = pl.pallas_call(
        _masked_maxpool_kernel,
        out_shape=jax.ShapeDtypeStruct((B, 1, D), jnp.float32),
        grid_spec=pltpu.PrefetchScalarGridSpec(
            num_scalar_prefetch=0, grid=(B, nS),
            in_specs=[seq_spec, mask_spec],
            out_specs=pooled_spec),
        compiler_params=cparams,
    )(sequence_output, mask_f)

    # 2) FiLM conditioning + second masked max-pool -> final_pooled (B,1,D)
    weight_args = [kp["vecd"], kp["cpw1b"], kp["cpw2"], kp["wx"], kp["wz"], kp["bf"]]
    final_pooled = pl.pallas_call(
        _film_kernel,
        out_shape=jax.ShapeDtypeStruct((B, 1, D), jnp.float32),
        grid_spec=pltpu.PrefetchScalarGridSpec(
            num_scalar_prefetch=0, grid=(B, nS),
            in_specs=[seq_spec, mask_spec, chem_spec, pooled_spec]
                     + [resident(w) for w in weight_args],
            out_specs=pooled_spec),
        compiler_params=cparams,
    )(sequence_output, mask_f, chemical_features, pooled, *weight_args)

    # 3) both classifier heads in one batched lane-dense kernel
    logits = pl.pallas_call(
        _heads_kernel,
        out_shape=jax.ShapeDtypeStruct((B, 4), jnp.float32),
    )(final_pooled[:, 0, :], kp["hw1"], kp["hb1"], kp["hln"], kp["hw2"], kp["hb2"])

    return logits[:, :2], logits[:, 2:]


# --------------------------------------------------------------------------
# Pure-JAX reference (mirrors the kernel's bf16 matmul precision so the check
# can stay tight; in full f32 it matches the PyTorch module's math exactly).
# --------------------------------------------------------------------------
def forward_reference(x, mask, chem, p):
    def dot_bf(a, b):
        return jnp.dot(a.astype(jnp.bfloat16), b.astype(jnp.bfloat16),
                       preferred_element_type=jnp.float32)

    m = mask[..., None]
    pooled = jnp.max(jnp.where(m, x, -jnp.inf), axis=1)                 # (B, D)
    x_n = _ln(x, p["lnx_g"], p["lnx_b"])

    def cp(c):
        h = (c[..., 0:1] * p["cp_w1"][0:1, :] + c[..., 1:2] * p["cp_w1"][1:2, :]
             + c[..., 2:3] * p["cp_w1"][2:3, :] + p["cp_b1"])
        h = jnp.maximum(h, 0.0)
        h = dot_bf(h, p["cp_w2"]) + p["cp_b2"]
        return _ln(h, p["cp_lng"], p["cp_lnb"])

    z = pooled[:, None, :] + cp(chem[..., :3]) + cp(chem[..., 3:])
    gamma = dot_bf(x_n, p["wxg"]) + dot_bf(z, p["wzg"]) + p["bfg"]
    beta = dot_bf(x_n, p["wxb"]) + dot_bf(z, p["wzb"]) + p["bfb"]
    out = gamma * x_n + beta
    fp = jnp.max(jnp.where(m, out, -jnp.inf), axis=1)                   # (B, D)

    def head(pre):
        h = dot_bf(fp, p[pre + "w1"]) + p[pre + "b1"]
        h = jnp.maximum(_ln(h, p[pre + "lng"], p[pre + "lnb"]), 0.0)
        return dot_bf(h, p[pre + "w2"]) + p[pre + "b2"]

    return head("c1"), head("c2")


# --------------------------------------------------------------------------
if __name__ == "__main__":
    key = jax.random.PRNGKey(0)
    B, S, D = 2, 16, 32          # small stand-in for (batch, seq~1k, hidden=640)
    block_s = 8                  # exercises the multi-tile reduction path
    k1, k2, k3 = jax.random.split(key, 3)

    sequence_output = jax.random.normal(k1, (B, S, D), dtype=jnp.float32)
    chemical_features = jax.random.normal(k2, (B, S, 6), dtype=jnp.float32)
    lengths = jnp.array([S, S - 5])
    mask = jnp.arange(S)[None, :] < lengths[:, None]      # (B, S) bool

    params = init_params(k3, D)

    logits1, logits2 = forward_pallas(sequence_output, mask, chemical_features,
                                      params, block_s=block_s)
    jax.block_until_ready((logits1, logits2))

    ref1, ref2 = forward_reference(sequence_output, mask, chemical_features, params)
    # bf16 matmul inputs => tolerance ~1e-2 vs the (mirrored) reference
    np.testing.assert_allclose(np.asarray(logits1), np.asarray(ref1), rtol=1e-2, atol=1e-2)
    np.testing.assert_allclose(np.asarray(logits2), np.asarray(ref2), rtol=1e-2, atol=1e-2)

    print("KERNEL_OK")
</pallas_src>

<mosaic_0001>
module attributes {stable_mosaic.version = 11 : i64} {
  func.func @_masked_maxpool_kernel(%arg0: i32, %arg1: i32, %arg2: memref<1x8x32xf32, #tpu.memory_space<vmem>>, %arg3: memref<1x8x1xf32, #tpu.memory_space<vmem>>, %arg4: memref<1x1x32xf32, #tpu.memory_space<vmem>>) attributes {dimension_semantics = [#tpu.dimension_semantics<parallel>, #tpu.dimension_semantics<arbitrary>], iteration_bounds = array<i64: 2, 2>, scalar_prefetch = 0 : i64, scratch_operands = 0 : i64, tpu.core_type = #tpu.core_type<tc>, window_params = [{transform_indices = @transform_0, window_bounds = array<i64: 1, 8, 32>}, {transform_indices = @transform_1, window_bounds = array<i64: 1, 8, 1>}, {transform_indices = @transform_2, window_bounds = array<i64: 1, 1, 32>}]} {
    %c0 = arith.constant 0 : index
    %c0_0 = arith.constant 0 : index
    %c0_1 = arith.constant 0 : index
    %0 = vector.load %arg3[%c0, %c0_0, %c0_1] : memref<1x8x1xf32, #tpu.memory_space<vmem>>, vector<1x8x1xf32>
    %1 = vector.shape_cast %0 : vector<1x8x1xf32> to vector<8x1xf32>
    %cst = arith.constant 1.000000e+00 : f32
    %2 = vector.broadcast %cst : f32 to vector<8x1xf32>
    %3 = arith.subf %1, %2 : vector<8x1xf32>
    %cst_2 = arith.constant 1.000000e+30 : f32
    %4 = vector.broadcast %cst_2 : f32 to vector<8x1xf32>
    %5 = arith.mulf %3, %4 : vector<8x1xf32>
    %c0_3 = arith.constant 0 : index
    %c0_4 = arith.constant 0 : index
    %c0_5 = arith.constant 0 : index
    %6 = vector.load %arg2[%c0_3, %c0_4, %c0_5] : memref<1x8x32xf32, #tpu.memory_space<vmem>>, vector<1x8x32xf32>
    %7 = vector.shape_cast %6 : vector<1x8x32xf32> to vector<8x32xf32>
    %8 = vector.broadcast %5 : vector<8x1xf32> to vector<8x32xf32>
    %9 = arith.addf %7, %8 : vector<8x32xf32>
    %cst_6 = arith.constant dense<0xFF800000> : vector<32xf32>
    %10 = vector.multi_reduction <maximumf>, %9, %cst_6 [0] : vector<8x32xf32> to vector<32xf32>
    %11 = vector.shape_cast %10 : vector<32xf32> to vector<1x32xf32>
    %c0_i32 = arith.constant 0 : i32
    %12 = arith.cmpi eq, %arg1, %c0_i32 : i32
    %13 = arith.extui %12 : i1 to i32
    %c0_i32_7 = arith.constant 0 : i32
    %14 = arith.cmpi ne, %13, %c0_i32_7 : i32
    scf.if %14 {
      %cst_14 = arith.constant -1.000000e+30 : f32
      %21 = vector.broadcast %cst_14 : f32 to vector<1x32xf32>
      %c0_15 = arith.constant 0 : index
      %c0_16 = arith.constant 0 : index
      %c0_17 = arith.constant 0 : index
      %22 = vector.load %arg4[%c0_15, %c0_16, %c0_17] : memref<1x1x32xf32, #tpu.memory_space<vmem>>, vector<1x1x32xf32>
      %23 = vector.shape_cast %22 : vector<1x1x32xf32> to vector<1x32xf32>
      %24 = vector.shape_cast %21 : vector<1x32xf32> to vector<1x1x32xf32>
      tpu.vector_store %arg4[%c0_15, %c0_16, %c0_17], %24 {strides = array<i32>} : memref<1x1x32xf32, #tpu.memory_space<vmem>>, vector<1x1x32xf32>,
    } else {
    }
    %c0_8 = arith.constant 0 : index
    %c0_9 = arith.constant 0 : index
    %c0_10 = arith.constant 0 : index
    %15 = vector.load %arg4[%c0_8, %c0_9, %c0_10] : memref<1x1x32xf32, #tpu.memory_space<vmem>>, vector<1x1x32xf32>
    %16 = vector.shape_cast %15 : vector<1x1x32xf32> to vector<1x32xf32>
    %17 = arith.maximumf %16, %11 : vector<1x32xf32>
    %c0_11 = arith.constant 0 : index
    %c0_12 = arith.constant 0 : index
    %c0_13 = arith.constant 0 : index
    %18 = vector.load %arg4[%c0_11, %c0_12, %c0_13] : memref<1x1x32xf32, #tpu.memory_space<vmem>>, vector<1x1x32xf32>
    %19 = vector.shape_cast %18 : vector<1x1x32xf32> to vector<1x32xf32>
    %20 = vector.shape_cast %17 : vector<1x32xf32> to vector<1x1x32xf32>
    tpu.vector_store %arg4[%c0_11, %c0_12, %c0_13], %20 {strides = array<i32>} : memref<1x1x32xf32, #tpu.memory_space<vmem>>, vector<1x1x32xf32>,
    return
  }
  func.func @transform_0(%arg0: i32, %arg1: i32) -> (i32, i32, i32) {
    %c0_i32 = arith.constant 0 : i32
    %c0_i32_0 = arith.constant 0 : i32
    return %arg0, %arg1, %c0_i32 : i32, i32, i32
  }
  func.func @transform_1(%arg0: i32, %arg1: i32) -> (i32, i32, i32) {
    %c0_i32 = arith.constant 0 : i32
    %c0_i32_0 = arith.constant 0 : i32
    return %arg0, %arg1, %c0_i32 : i32, i32, i32
  }
  func.func @transform_2(%arg0: i32, %arg1: i32) -> (i32, i32, i32) {
    %c0_i32 = arith.constant 0 : i32
    %c0_i32_0 = arith.constant 0 : i32
    %c0_i32_1 = arith.constant 0 : i32
    return %arg0, %c0_i32, %c0_i32_0 : i32, i32, i32
  }
}

</mosaic_0001>

<llo_original>
// kernel: tpu_custom_call.1
$region0: #{tpu_custom_call.1}
  #allocation0 [shape = 'u32[]', space=smem, size = 0x4, offset = 0x4, fixed_abs, tag = 'smem constant byte address 0x4 - core index']
  #allocation1 [shape = 'u32[72,128]{1,0:T(1,128)}', space=vmem, size = 0x9000, scoped, tag = 'internal scratch']
  %s0 = inlined_call_operand.vmem [shape: f32[2,16,32], index: 0, kind: input, shape index: {}]
  %s1 = inlined_call_operand.vmem [shape: f32[2,16,1], index: 1, kind: input, shape index: {}]
  %s2 = inlined_call_operand.hbm [shape: f32[2,1,32], index: 2, kind: output, shape index: {}]
  %s3 = sld [smem:[#allocation0]]
  $region45: #{tpu_custom_call.1} parent=0
    _
  %s5 = ssub.s32 1, %s3
  %s6 = scalar_select 0, %s5, %s3
  $region1: #{tpu_custom_call.1} parent=0
    #allocation2 [shape = 'u8[1024]{0}', space=vmem, size = 0x400, scoped, tag = 'output window, operand 0']
    #allocation3 [shape = 's32[2]{0}', space=sflag, size = 0x8, scoped, tag = 'scoped memory for tpu_custom_call.1']
    %7 = vsyncpa [#allocation3], 0
    %s8 = scalar_lea.sflag [#allocation3], 1
    %9 = vsyncpa %s8, 0
    loop: start=0, step=1, limit=6
    $region2: #{tpu_custom_call.1} parent=1 // loop_pre_header
      _
    $region3: #{tpu_custom_call.1} parent=1 // loop_header
      %s11 = sphi 0, %s15
      %p12 = scmp.ge.s32.totalorder %s11, 6
      %s18 = sphi 0, %s30
      %s19 = sphi 0, %s26
      %s20 = sphi 0, %s18
      %s21 = sphi 0, %s19
      %s22 = sphi 0, %s20
      %s23 = sphi 0, %s21
      %s35 = sphi 0, %s37
      %s38 = sphi 0, %s35
      %s39 = sphi 0, %s38
      %s55 = sphi 0, %s39
      %s63 = sphi 0, %s65
      %s66 = sphi 0, %s63
      %s67 = sphi 0, %s66
      %s83 = sphi 0, %s67
      %s89 = sphi 0, %s91
      %s92 = sphi 0, %s89
      %s93 = sphi 0, %s92
      %s109 = sphi 0, %s93
    $region4: #{tpu_custom_call.1} parent=1 // loop_header_branch
      %14 = sbr.rel (%p12) target = $region8
    $region5: #{tpu_custom_call.1} parent=1 // loop_body
      %s16 = ssub.s32 %s11, 1
      %s17 = ssub.s32 %s11, 2
      %s24 = sadd.s32 1, %s19
      %p25 = scmp.ge.s32.totalorder %s24, 2
      %s26 = scalar_select %p25, 0, %s24
      %s27 = sadd.s32 1, %s18
      %s28 = scalar_select %p25, %s27, %s18
      %p29 = scmp.ge.s32.totalorder %s28, 2
      %s30 = scalar_select %p29, 0, %s28
      %s31 = ssub.s32 %s18, %s30
      %s32 = ssub.s32 %s19, %s26
      %s33 = sor.u32 %s31, %s32
      %p34 = scmp.eq.s32.totalorder %s33, 0
      %s36 = sadd.s32 %s35, 1
      %s37 = scalar_select %p34, %s35, %s36
      %p40 = pneg %p34
      %p41 = scmp.eq.s32.totalorder %s11, 3
      %p42 = por %p40, %p41
      %p43 = scmp.ne.s32.totalorder %s35, %s38
      %p44 = scmp.eq.s32.totalorder %s11, 0
      %p45 = por %p43, %p44
      %p46 = scmp.ne.s32.totalorder %s35, %s38
      %p47 = scmp.eq.s32.totalorder %s16, 3
      %p48 = por %p46, %p47
      %p49 = scmp.ne.s32.totalorder %s38, %s39
      %p50 = scmp.eq.s32.totalorder %s16, 0
      %p51 = por %p49, %p50
      %p52 = scmp.ne.s32.totalorder %s38, %s39
      %p53 = scmp.eq.s32.totalorder %s17, 3
      %p54 = por %p52, %p53
      %p56 = scmp.ne.s32.totalorder %s39, %s55
      %p57 = scmp.eq.s32.totalorder %s17, 0
      %p58 = por %p56, %p57
      %s59 = ssub.s32 %s18, %s30
      %s60 = ssub.s32 %s19, %s26
      %s61 = sor.u32 %s59, %s60
      %p62 = scmp.eq.s32.totalorder %s61, 0
      %s64 = sadd.s32 %s63, 1
      %s65 = scalar_select %p62, %s63, %s64
      %p68 = pneg %p62
      %p69 = scmp.eq.s32.totalorder %s11, 3
      %p70 = por %p68, %p69
      %p71 = scmp.ne.s32.totalorder %s63, %s66
      %p72 = scmp.eq.s32.totalorder %s11, 0
      %p73 = por %p71, %p72
      %p74 = scmp.ne.s32.totalorder %s63, %s66
      %p75 = scmp.eq.s32.totalorder %s16, 3
      %p76 = por %p74, %p75
      %p77 = scmp.ne.s32.totalorder %s66, %s67
      %p78 = scmp.eq.s32.totalorder %s16, 0
      %p79 = por %p77, %p78
      %p80 = scmp.ne.s32.totalorder %s66, %s67
      %p81 = scmp.eq.s32.totalorder %s17, 3
      %p82 = por %p80, %p81
      %p84 = scmp.ne.s32.totalorder %s67, %s83
      %p85 = scmp.eq.s32.totalorder %s17, 0
      %p86 = por %p84, %p85
      %s87 = ssub.s32 %s18, %s30
      %p88 = scmp.eq.s32.totalorder %s87, 0
      %s90 = sadd.s32 %s89, 1
      %s91 = scalar_select %p88, %s89, %s90
      %p94 = pneg %p88
      %p95 = scmp.eq.s32.totalorder %s11, 3
      %p96 = por %p94, %p95
      %p97 = scmp.ne.s32.totalorder %s89, %s92
      %p98 = scmp.eq.s32.totalorder %s11, 0
      %p99 = por %p97, %p98
      %p100 = scmp.ne.s32.totalorder %s89, %s92
      %p101 = scmp.eq.s32.totalorder %s16, 3
      %p102 = por %p100, %p101
      %p103 = scmp.ne.s32.totalorder %s92, %s93
      %p104 = scmp.eq.s32.totalorder %s16, 0
      %p105 = por %p103, %p104
      %p106 = scmp.ne.s32.totalorder %s92, %s93
      %p107 = scmp.eq.s32.totalorder %s17, 3
      %p108 = por %p106, %p107
      %p110 = scmp.ne.s32.totalorder %s93, %s109
      %p111 = scmp.eq.s32.totalorder %s17, 0
      %p112 = por %p110, %p111
      %p113 = scmp.le.s32.totalorder 1, %s11
      %p114 = scmp.lt.s32.totalorder %s11, 5
      %p115 = pnand %p113, %p114
      %p116 = pneg %p115
      // Predicated region
      $region9: #{tpu_custom_call.1} parent=5 // pred_check
        _
      $region10: #{tpu_custom_call.1} parent=5 // pred_check_branch
        %118 = sbr.rel (%p115) target = $region12
      $region11: #{tpu_custom_call.1} parent=5 // pred_region
        %s119 = ssub.s32 %s11, 1
      $region12: #{tpu_custom_call.1} parent=5 // pred_fallthru
        _
      %p120 = scmp.lt.s32.totalorder %s11, 4
      // Predicated region
      $region13: #{tpu_custom_call.1} parent=5 // pred_check
        %p121 = pneg %p120
      $region14: #{tpu_custom_call.1} parent=5 // pred_check_branch
        %123 = sbr.rel (%p121) target = $region16
      $region15: #{tpu_custom_call.1} parent=5 // pred_region
        // Predicated region
        $region17: #{tpu_custom_call.1} parent=15 // pred_check
          %p124 = pneg %p45
        $region18: #{tpu_custom_call.1} parent=15 // pred_check_branch
          %126 = sbr.rel (%p124) target = $region20
        $region19: #{tpu_custom_call.1} parent=15 // pred_region
          %p127 = scmp.lt.s32.totalorder %s18, 1
          %s128 = scalar_select %p127, %s18, 1
          %p129 = scmp.lt.s32.totalorder %s19, 1
          %s130 = scalar_select %p129, %s19, 1
          %s131 = smul.addr %s128, 2
          %s132 = sadd.s32 %s130, %s131
          %s133 = smul.addr %s132, 8
          %s134 = scalar_lea.vmem %s0, %s133
        $region20: #{tpu_custom_call.1} parent=15 // pred_fallthru
          _
        // Predicated region
        $region21: #{tpu_custom_call.1} parent=15 // pred_check
          %p135 = pneg %p73
        $region22: #{tpu_custom_call.1} parent=15 // pred_check_branch
          %137 = sbr.rel (%p135) target = $region24
        $region23: #{tpu_custom_call.1} parent=15 // pred_region
          %p138 = scmp.lt.s32.totalorder %s18, 1
          %s139 = scalar_select %p138, %s18, 1
          %p140 = scmp.lt.s32.totalorder %s19, 1
          %s141 = scalar_select %p140, %s19, 1
          %s142 = smul.addr %s139, 2
          %s143 = sadd.s32 %s141, %s142
          %s144 = smul.addr %s143, 8
          %s145 = scalar_lea.vmem %s1, %s144
        $region24: #{tpu_custom_call.1} parent=15 // pred_fallthru
          _
      $region16: #{tpu_custom_call.1} parent=5 // pred_fallthru
        _
      %p146 = scmp.le.s32.totalorder 1, %s11
      %p147 = scmp.lt.s32.totalorder %s11, 5
      %p148 = pnand %p146, %p147
      %p149 = pneg %p148
      // Predicated region
      $region25: #{tpu_custom_call.1} parent=5 // pred_check
        _
      $region26: #{tpu_custom_call.1} parent=5 // pred_check_branch
        %151 = sbr.rel (%p148) target = $region28
      $region27: #{tpu_custom_call.1} parent=5 // pred_region
        %s152 = ssub.s32 %s11, 1
        %p153 = scmp.lt.s32.totalorder %s20, 1
        %s154 = scalar_select %p153, %s20, 1
        %p155 = scmp.lt.s32.totalorder %s21, 1
        %s156 = scalar_select %p155, %s21, 1
        %s157 = smul.addr %s154, 2
        %s158 = sadd.s32 %s156, %s157
        %s159 = smul.addr %s158, 8
        %s160 = scalar_lea.vmem %s0, %s159
        %p161 = pneg %p51
        %p162 = pneg %p48
        %p163 = scmp.lt.s32.totalorder %s20, 1
        %s164 = scalar_select %p163, %s20, 1
        %p165 = scmp.lt.s32.totalorder %s21, 1
        %s166 = scalar_select %p165, %s21, 1
        %s167 = smul.addr %s164, 2
        %s168 = sadd.s32 %s166, %s167
        %s169 = smul.addr %s168, 8
        %s170 = scalar_lea.vmem %s1, %s169
        %p171 = pneg %p79
        %p172 = pneg %p76
        %p173 = pneg %p105
        %p174 = pneg %p102
        %s175 = sand.u32 %s92, 1
        %s176 = scalar_lea.sflag [#allocation3], %s175
        %s177 = sand.u32 %s92, 1
        %s178 = scalar_lea.vmem [#allocation2], %s177
        %p179 = scmp.lt.s32.totalorder %s20, 1
        %s180 = scalar_select %p179, %s20, 1
        %p181 = scmp.lt.s32.totalorder %s21, 1
        %s182 = scalar_select %p181, %s21, 1
        %s183 = smul.addr %s180, 2
        %s184 = sadd.s32 %s182, %s183
        %s185 = smul.addr %s184, 8
        %s186 = scalar_lea.vmem %s0, %s185
        %p187 = scmp.lt.s32.totalorder %s20, 1
        %s188 = scalar_select %p187, %s20, 1
        %p189 = scmp.lt.s32.totalorder %s21, 1
        %s190 = scalar_select %p189, %s21, 1
        %s191 = smul.addr %s188, 2
        %s192 = sadd.s32 %s190, %s191
        %s193 = smul.addr %s192, 8
        %s194 = scalar_lea.vmem %s1, %s193
        %v195 = vld [vmem:[%s194] sm:$0xff]
        %v196 = vsub.f32 %v195, 1.0
        %v197 = vmul.f32 %v196, 1e+30
        %v198 = vld [vmem:[%s186] sm:$0xff]
        %200 = vset.pattern.permute.xlu0 0
        %201 = vperm.xlu0 %200, %v197
        %v202 = vpop.permute.xlu0 %201
        %v204 = vadd.f32 %v198, %v202
        %vm205 = vcmask 261120
        %v206 = vsel %vm205, %v204, -inf
        %v207 = vrot.slane %v206, 4
        %v208 = vmax.f32 %v206, %v207
        %v209 = vrot.slane %v208, 2
        %v210 = vmax.f32 %v208, %v209
        %v211 = vrot.slane %v210, 1
        %v212 = vmax.f32 %v210, %v211
        %p213 = scmp.eq.s32.totalorder %s21, 0
        // Predicated region
        $region29: #{tpu_custom_call.1} parent=27 // pred_check
          %p214 = pneg %p213
        $region30: #{tpu_custom_call.1} parent=27 // pred_check_branch
          %216 = sbr.rel (%p214) target = $region32
        $region31: #{tpu_custom_call.1} parent=27 // pred_region
          %vm217 = vcmask 253952
          %218 = vst.msk [vmem:[%s178] sm:$0x1] %vm217, -1e+30
        $region32: #{tpu_custom_call.1} parent=27 // pred_fallthru
          _
        %v219 = vld [vmem:[%s178] sm:$0x1]
        %v220 = vmax.f32 %v219, %v212
        %vm221 = vcmask 253952
        %222 = vst.msk [vmem:[%s178] sm:$0x1] %vm221, %v220
        %s223 = sand.u32 %s92, 1
        %s224 = scalar_lea.sflag [#allocation3], %s223
        %s225 = sand.u32 %s92, 1
        %s226 = scalar_lea.vmem [#allocation2], %s225
        // Predicated region
        $region33: #{tpu_custom_call.1} parent=27 // pred_check
          %p227 = pneg %p102
        $region34: #{tpu_custom_call.1} parent=27 // pred_check_branch
          %229 = sbr.rel (%p227) target = $region36
        $region35: #{tpu_custom_call.1} parent=27 // pred_region
          %231 = vsyncadd %s224, 0
          %s232 = scalar_lea.hbm %s2, %s20
          %s234 = sshll.u32 %s226, 4
          %s235 = int_to_ptr.vmem [resolvable:$true] %s234
          %s236 = sshll.u32 %s232, 4
          %s237 = int_to_ptr.hbm [resolvable:$true] %s236
          %239 = dma.vmem_to_hbm [thread:$0]  %s235, 16, %s237, %s224
        $region36: #{tpu_custom_call.1} parent=27 // pred_fallthru
          _
      $region28: #{tpu_custom_call.1} parent=5 // pred_fallthru
        _
      %p240 = scmp.le.s32.totalorder 2, %s11
      // Predicated region
      $region37: #{tpu_custom_call.1} parent=5 // pred_check
        %p241 = pneg %p240
      $region38: #{tpu_custom_call.1} parent=5 // pred_check_branch
        %243 = sbr.rel (%p241) target = $region40
      $region39: #{tpu_custom_call.1} parent=5 // pred_region
        %s244 = ssub.s32 %s11, 2
        // Predicated region
        $region41: #{tpu_custom_call.1} parent=39 // pred_check
          %p245 = pneg %p108
        $region42: #{tpu_custom_call.1} parent=39 // pred_check_branch
          %247 = sbr.rel (%p245) target = $region44
        $region43: #{tpu_custom_call.1} parent=39 // pred_region
          %s248 = sand.u32 %s93, 1
          %s249 = scalar_lea.sflag [#allocation3], %s248
          %s250 = sand.u32 %s93, 1
          %s251 = scalar_lea.vmem [#allocation2], %s250
          %253 = dma.done %s249, 16
        $region44: #{tpu_custom_call.1} parent=39 // pred_fallthru
          _
      $region40: #{tpu_custom_call.1} parent=5 // pred_fallthru
        _
    $region6: #{tpu_custom_call.1} parent=1 // loop_footer
      %s15 = sadd.s32 1, %s11
    $region7: #{tpu_custom_call.1} parent=1 // loop_footer_branch
      %10 = sbr.rel target = $region3
    $region8: #{tpu_custom_call.1} parent=1 // loop_exit
      _
    %254 = vsyncpa [#allocation3], 1
    %s255 = scalar_lea.sflag [#allocation3], 1
    %256 = vsyncpa %s255, 1

</llo_original>
